<compile_context>
chip_gen: v7x
topology: tpu7x:2x2x1
jax: 0.10.0
libtpu: 0.0.40
codegen_flags: <defaults>
</compile_context>

<pallas_src>
import functools

import jax
import jax.numpy as jnp
from jax.experimental import pallas as pl
from jax.experimental.pallas import tpu as pltpu

BN_EPS = 1e-5
LANE = 128


def _round_up(n, m):
    return (n + m - 1) // m * m


def _bn_relu(h, gamma, beta):
    """Training-mode BatchNorm1d (biased batch var) fused with ReLU.

    Two-pass (centered) variance in f32 for numerical safety, then a single
    fused multiply-add per element: y = relu((h - mean) * scale + beta).
    """
    inv_n = 1.0 / h.shape[0]
    mean = jnp.sum(h, axis=0, keepdims=True) * inv_n
    c = h - mean
    var = jnp.sum(c * c, axis=0, keepdims=True) * inv_n
    scale = jax.lax.rsqrt(var + BN_EPS) * gamma
    return jnp.maximum(c * scale + beta, 0.0)


def mlp_kernel(x_ref, w1_ref, w2_ref, w3_ref, bn_ref, b3_ref, o_ref):
    # x_ref: bf16 [B, in]; bn_ref: f32 [4, H] = [gamma1; beta1; gamma2; beta2]
    x = x_ref[...]
    bn = bn_ref[...]

    # fc1 (bias omitted: cancelled by BN's batch-mean subtraction) + BN1 + ReLU
    h = jnp.dot(x, w1_ref[...], preferred_element_type=jnp.float32)
    h = _bn_relu(h, bn[0:1, :], bn[1:2, :])

    # fc2 (bias omitted) + BN2 + ReLU
    h = jnp.dot(h.astype(jnp.bfloat16), w2_ref[...],
                preferred_element_type=jnp.float32)
    h = _bn_relu(h, bn[2:3, :], bn[3:4, :])

    # fc3 (lane-dense padded output, unmasked store)
    out = jnp.dot(h.astype(jnp.bfloat16), w3_ref[...],
                  preferred_element_type=jnp.float32) + b3_ref[...]
    o_ref[...] = out.astype(o_ref.dtype)


def prepare_params(params):
    """One-time parameter prep (hoisted out of the per-call path).

    Returns (prepped_arrays, out_size): bf16 MXU weights, fc3 weight/bias
    padded to a 128-lane multiple, and the four BN vectors packed into one
    [4, H] array.
    """
    (w1, b1, g1, be1, w2, b2, g2, be2, w3, b3) = params
    del b1, b2  # exactly cancelled by training-mode BN (batch-mean subtraction)

    out_size = w3.shape[1]
    out_pad = _round_up(out_size, LANE)

    w1_bf = w1.astype(jnp.bfloat16)
    w2_bf = w2.astype(jnp.bfloat16)
    # Pad fc3's output dim to a multiple of 128 -> unmasked, lane-dense stores.
    # Padded columns are zero, so padded outputs are exactly 0 and sliced off.
    w3_p = jnp.zeros((w3.shape[0], out_pad), jnp.float32).at[:, :out_size].set(w3)
    b3_p = jnp.zeros((1, out_pad), jnp.float32).at[:, :out_size].set(b3)
    w3_bf = w3_p.astype(jnp.bfloat16)

    bn_params = jnp.concatenate([g1, be1, g2, be2], axis=0)
    return (w1_bf, w2_bf, w3_bf, bn_params, b3_p), out_size


def _vmem_budget_bytes(B, in_size, H, out_pad):
    weights = 2 * (in_size * H + H * H + H * out_pad)      # bf16, resident
    acts = 2 * B * in_size + 4 * B * out_pad + 2 * 4 * B * H
    small = 4 * (4 * H + out_pad)
    need = weights + acts + small
    # 2x headroom + margin; never below the 32 MiB scoped default, cap well
    # under v7x's 64 MiB physical VMEM is a follow-up (see TODO on tiling).
    return int(min(max(2 * need + (4 << 20), 32 << 20), 100 << 20))


@functools.partial(jax.jit, static_argnames=("out_size",))
def mlp_forward(x, prepped, out_size):
    w1_bf, w2_bf, w3_bf, bn_params, b3_p = prepped
    B, in_size = x.shape
    H = w1_bf.shape[1]
    out_pad = w3_bf.shape[1]

    # bf16 input for the MXU (accumulation in the kernel is f32).
    x_bf = x.astype(jnp.bfloat16)

    flops = 2 * B * (in_size * H + H * H + H * out_pad)
    bytes_accessed = (
        2 * B * in_size                                        # x (bf16)
        + 2 * (in_size * H + H * H + H * out_pad)              # weights (bf16)
        + 4 * (4 * H + out_pad)                                # bn + b3 (f32)
        + 4 * B * out_pad                                      # output (f32)
    )
    cost = pl.CostEstimate(flops=flops, transcendentals=2 * H,
                           bytes_accessed=bytes_accessed)

    vmem = pl.BlockSpec(memory_space=pltpu.MemorySpace.VMEM)
    out_padded = pl.pallas_call(
        mlp_kernel,
        out_shape=jax.ShapeDtypeStruct((B, out_pad), jnp.float32),
        in_specs=[vmem] * 6,
        out_specs=vmem,
        cost_estimate=cost,
        compiler_params=pltpu.CompilerParams(
            vmem_limit_bytes=_vmem_budget_bytes(B, in_size, H, out_pad)),
    )(x_bf, w1_bf, w2_bf, w3_bf, bn_params, b3_p)
    # Slice inside the same jit so XLA fuses it with the custom-call output.
    return out_padded[:, :out_size]


def init_params(key, input_size, hidden_size, output_size):
    """Deterministic init mirroring nn.Linear's default U(-1/sqrt(fan_in), +...)."""
    ks = jax.random.split(key, 6)

    def linear(kw, kb, fan_in, fan_out):
        bound = 1.0 / (fan_in ** 0.5)
        # stored as [in, out] so the kernel computes x @ W
        w = jax.random.uniform(kw, (fan_in, fan_out), jnp.float32, -bound, bound)
        b = jax.random.uniform(kb, (1, fan_out), jnp.float32, -bound, bound)
        return w, b

    w1, b1 = linear(ks[0], ks[1], input_size, hidden_size)
    w2, b2 = linear(ks[2], ks[3], hidden_size, hidden_size)
    w3, b3 = linear(ks[4], ks[5], hidden_size, output_size)
    # BatchNorm1d fresh-init: gamma=1, beta=0
    g1 = jnp.ones((1, hidden_size), jnp.float32)
    be1 = jnp.zeros((1, hidden_size), jnp.float32)
    g2 = jnp.ones((1, hidden_size), jnp.float32)
    be2 = jnp.zeros((1, hidden_size), jnp.float32)
    return (w1, b1, g1, be1, w2, b2, g2, be2, w3, b3)


def reference_forward_f32(x, params):
    """Original-module semantics: f32 matmuls, biases included, two-pass BN."""
    (w1, b1, g1, be1, w2, b2, g2, be2, w3, b3) = params

    def bn(h, g, be):
        m = jnp.mean(h, axis=0, keepdims=True)
        v = jnp.mean((h - m) ** 2, axis=0, keepdims=True)
        return (h - m) * jax.lax.rsqrt(v + BN_EPS) * g + be

    h = jnp.maximum(bn(x @ w1 + b1, g1, be1), 0.0)
    h = jnp.maximum(bn(h @ w2 + b2, g2, be2), 0.0)
    return h @ w3 + b3


def reference_forward_kernel_equiv(x, params):
    """Same math as the kernel (bf16 matmul operands, fused two-pass BN)."""
    (w1, b1, g1, be1, w2, b2, g2, be2, w3, b3) = params
    del b1, b2

    def bn_relu(h, g, be):
        inv_n = 1.0 / h.shape[0]
        mean = jnp.sum(h, axis=0, keepdims=True) * inv_n
        c = h - mean
        var = jnp.sum(c * c, axis=0, keepdims=True) * inv_n
        scale = jax.lax.rsqrt(var + BN_EPS) * g
        return jnp.maximum(c * scale + be, 0.0)

    h = jnp.dot(x.astype(jnp.bfloat16), w1.astype(jnp.bfloat16),
                preferred_element_type=jnp.float32)
    h = bn_relu(h, g1, be1)
    h = jnp.dot(h.astype(jnp.bfloat16), w2.astype(jnp.bfloat16),
                preferred_element_type=jnp.float32)
    h = bn_relu(h, g2, be2)
    return jnp.dot(h.astype(jnp.bfloat16), w3.astype(jnp.bfloat16),
                   preferred_element_type=jnp.float32) + b3


if __name__ == "__main__":
    key = jax.random.PRNGKey(0)
    k_x, k_p = jax.random.split(key)

    batch = 8
    input_size = 32
    hidden_size = 32
    output_size = 16

    x = jax.random.normal(k_x, (batch, input_size), jnp.float32)
    params = init_params(k_p, input_size, hidden_size, output_size)

    # One-time parameter prep (hoisted out of the forward path).
    prepped, out_size = prepare_params(params)

    out = jax.block_until_ready(mlp_forward(x, prepped, out_size))
    ref_equiv = jax.block_until_ready(reference_forward_kernel_equiv(x, params))
    ref_f32 = jax.block_until_ready(reference_forward_f32(x, params))

    assert out.shape == (batch, output_size)
    # Tight check against a JAX reference doing the same (bf16-MXU) math.
    assert jnp.allclose(out, ref_equiv, atol=1e-4, rtol=1e-4), \
        "mismatch vs kernel-equivalent JAX reference"
    # Looser check against the exact f32 PyTorch-module (training-mode) math;
    # the difference is only bf16 weight/activation rounding in the matmuls.
    assert jnp.allclose(out, ref_f32, atol=5e-2, rtol=5e-2), \
        "mismatch vs f32 module reference"
    print("KERNEL_OK")
</pallas_src>

<mosaic_0001>
module attributes {stable_mosaic.version = 11 : i64} {
  func.func @mlp_kernel(%arg0: memref<8x32xbf16, #tpu.memory_space<vmem>>, %arg1: memref<32x32xbf16, #tpu.memory_space<vmem>>, %arg2: memref<32x32xbf16, #tpu.memory_space<vmem>>, %arg3: memref<32x128xbf16, #tpu.memory_space<vmem>>, %arg4: memref<4x32xf32, #tpu.memory_space<vmem>>, %arg5: memref<1x128xf32, #tpu.memory_space<vmem>>, %arg6: memref<8x128xf32, #tpu.memory_space<vmem>>) attributes {dimension_semantics = [], scalar_prefetch = 0 : i64, scratch_operands = 0 : i64, tpu.core_type = #tpu.core_type<tc>} {
    %c0 = arith.constant 0 : index
    %c0_0 = arith.constant 0 : index
    %0 = vector.load %arg0[%c0, %c0_0] : memref<8x32xbf16, #tpu.memory_space<vmem>>, vector<8x32xbf16>
    %c0_1 = arith.constant 0 : index
    %c0_2 = arith.constant 0 : index
    %1 = vector.load %arg4[%c0_1, %c0_2] : memref<4x32xf32, #tpu.memory_space<vmem>>, vector<4x32xf32>
    %c0_3 = arith.constant 0 : index
    %c0_4 = arith.constant 0 : index
    %2 = vector.load %arg1[%c0_3, %c0_4] : memref<32x32xbf16, #tpu.memory_space<vmem>>, vector<32x32xbf16>
    %cst = arith.constant dense<0.000000e+00> : vector<8x32xf32>
    %3 = tpu.matmul %0, %2, %cst {dimension_numbers = #tpu.dot_dimension_numbers<[1], [0], [0], [1], [0, 0, 1, 1], [], []>} : vector<8x32xbf16>, vector<32x32xbf16>, vector<8x32xf32> -> vector<8x32xf32>
    %4 = vector.extract_strided_slice %1 {offsets = [0, 0], sizes = [1, 32], strides = [1, 1]} : vector<4x32xf32> to vector<1x32xf32>
    %5 = vector.extract_strided_slice %1 {offsets = [1, 0], sizes = [1, 32], strides = [1, 1]} : vector<4x32xf32> to vector<1x32xf32>
    %cst_5 = arith.constant dense<0.000000e+00> : vector<32xf32>
    %6 = vector.multi_reduction <add>, %3, %cst_5 [0] : vector<8x32xf32> to vector<32xf32>
    %7 = vector.shape_cast %6 : vector<32xf32> to vector<1x32xf32>
    %cst_6 = arith.constant 1.250000e-01 : f32
    %8 = vector.broadcast %cst_6 : f32 to vector<1x32xf32>
    %9 = arith.mulf %7, %8 : vector<1x32xf32>
    %10 = vector.broadcast %9 : vector<1x32xf32> to vector<8x32xf32>
    %11 = arith.subf %3, %10 : vector<8x32xf32>
    %12 = arith.mulf %11, %11 : vector<8x32xf32>
    %cst_7 = arith.constant dense<0.000000e+00> : vector<32xf32>
    %13 = vector.multi_reduction <add>, %12, %cst_7 [0] : vector<8x32xf32> to vector<32xf32>
    %14 = vector.shape_cast %13 : vector<32xf32> to vector<1x32xf32>
    %cst_8 = arith.constant 1.250000e-01 : f32
    %15 = vector.broadcast %cst_8 : f32 to vector<1x32xf32>
    %16 = arith.mulf %14, %15 : vector<1x32xf32>
    %cst_9 = arith.constant 9.99999974E-6 : f32
    %17 = vector.broadcast %cst_9 : f32 to vector<1x32xf32>
    %18 = arith.addf %16, %17 : vector<1x32xf32>
    %19 = math.rsqrt %18 : vector<1x32xf32>
    %20 = arith.mulf %19, %4 : vector<1x32xf32>
    %21 = vector.broadcast %20 : vector<1x32xf32> to vector<8x32xf32>
    %22 = arith.mulf %11, %21 : vector<8x32xf32>
    %23 = vector.broadcast %5 : vector<1x32xf32> to vector<8x32xf32>
    %24 = arith.addf %22, %23 : vector<8x32xf32>
    %cst_10 = arith.constant 0.000000e+00 : f32
    %25 = vector.broadcast %cst_10 : f32 to vector<8x32xf32>
    %26 = arith.maximumf %24, %25 : vector<8x32xf32>
    %27 = arith.truncf %26 : vector<8x32xf32> to vector<8x32xbf16>
    %c0_11 = arith.constant 0 : index
    %c0_12 = arith.constant 0 : index
    %28 = vector.load %arg2[%c0_11, %c0_12] : memref<32x32xbf16, #tpu.memory_space<vmem>>, vector<32x32xbf16>
    %cst_13 = arith.constant dense<0.000000e+00> : vector<8x32xf32>
    %29 = tpu.matmul %27, %28, %cst_13 {dimension_numbers = #tpu.dot_dimension_numbers<[1], [0], [0], [1], [0, 0, 1, 1], [], []>} : vector<8x32xbf16>, vector<32x32xbf16>, vector<8x32xf32> -> vector<8x32xf32>
    %30 = vector.extract_strided_slice %1 {offsets = [2, 0], sizes = [1, 32], strides = [1, 1]} : vector<4x32xf32> to vector<1x32xf32>
    %31 = vector.extract_strided_slice %1 {offsets = [3, 0], sizes = [1, 32], strides = [1, 1]} : vector<4x32xf32> to vector<1x32xf32>
    %cst_14 = arith.constant dense<0.000000e+00> : vector<32xf32>
    %32 = vector.multi_reduction <add>, %29, %cst_14 [0] : vector<8x32xf32> to vector<32xf32>
    %33 = vector.shape_cast %32 : vector<32xf32> to vector<1x32xf32>
    %cst_15 = arith.constant 1.250000e-01 : f32
    %34 = vector.broadcast %cst_15 : f32 to vector<1x32xf32>
    %35 = arith.mulf %33, %34 : vector<1x32xf32>
    %36 = vector.broadcast %35 : vector<1x32xf32> to vector<8x32xf32>
    %37 = arith.subf %29, %36 : vector<8x32xf32>
    %38 = arith.mulf %37, %37 : vector<8x32xf32>
    %cst_16 = arith.constant dense<0.000000e+00> : vector<32xf32>
    %39 = vector.multi_reduction <add>, %38, %cst_16 [0] : vector<8x32xf32> to vector<32xf32>
    %40 = vector.shape_cast %39 : vector<32xf32> to vector<1x32xf32>
    %cst_17 = arith.constant 1.250000e-01 : f32
    %41 = vector.broadcast %cst_17 : f32 to vector<1x32xf32>
    %42 = arith.mulf %40, %41 : vector<1x32xf32>
    %cst_18 = arith.constant 9.99999974E-6 : f32
    %43 = vector.broadcast %cst_18 : f32 to vector<1x32xf32>
    %44 = arith.addf %42, %43 : vector<1x32xf32>
    %45 = math.rsqrt %44 : vector<1x32xf32>
    %46 = arith.mulf %45, %30 : vector<1x32xf32>
    %47 = vector.broadcast %46 : vector<1x32xf32> to vector<8x32xf32>
    %48 = arith.mulf %37, %47 : vector<8x32xf32>
    %49 = vector.broadcast %31 : vector<1x32xf32> to vector<8x32xf32>
    %50 = arith.addf %48, %49 : vector<8x32xf32>
    %cst_19 = arith.constant 0.000000e+00 : f32
    %51 = vector.broadcast %cst_19 : f32 to vector<8x32xf32>
    %52 = arith.maximumf %50, %51 : vector<8x32xf32>
    %53 = arith.truncf %52 : vector<8x32xf32> to vector<8x32xbf16>
    %c0_20 = arith.constant 0 : index
    %c0_21 = arith.constant 0 : index
    %54 = vector.load %arg3[%c0_20, %c0_21] : memref<32x128xbf16, #tpu.memory_space<vmem>>, vector<32x128xbf16>
    %cst_22 = arith.constant dense<0.000000e+00> : vector<8x128xf32>
    %55 = tpu.matmul %53, %54, %cst_22 {dimension_numbers = #tpu.dot_dimension_numbers<[1], [0], [0], [1], [0, 0, 1, 1], [], []>} : vector<8x32xbf16>, vector<32x128xbf16>, vector<8x128xf32> -> vector<8x128xf32>
    %c0_23 = arith.constant 0 : index
    %c0_24 = arith.constant 0 : index
    %56 = vector.load %arg5[%c0_23, %c0_24] : memref<1x128xf32, #tpu.memory_space<vmem>>, vector<1x128xf32>
    %57 = vector.broadcast %56 : vector<1x128xf32> to vector<8x128xf32>
    %58 = arith.addf %55, %57 : vector<8x128xf32>
    %c0_25 = arith.constant 0 : index
    %c0_26 = arith.constant 0 : index
    %59 = vector.load %arg6[%c0_25, %c0_26] : memref<8x128xf32, #tpu.memory_space<vmem>>, vector<8x128xf32>
    tpu.vector_store %arg6[%c0_25, %c0_26], %58 {strides = array<i32>} : memref<8x128xf32, #tpu.memory_space<vmem>>, vector<8x128xf32>,
    return
  }
}

</mosaic_0001>

<llo_original>
// kernel: mlp_forward.1
$region0: #{mlp_forward.1}
  #allocation0 [shape = 'u32[]', space=smem, size = 0x4, offset = 0x4, fixed_abs, tag = 'smem constant byte address 0x4 - core index']
  #allocation1 [shape = 'u32[144,128]{1,0:T(1,128)}', space=vmem, size = 0x12000, scoped, tag = 'internal scratch']
  %s0 = inlined_call_operand.vmem [shape: bf16[8,32], index: 0, kind: input, shape index: {}]
  %s1 = inlined_call_operand.hbm [shape: bf16[32,32], index: 1, kind: input, shape index: {}]
  %s2 = inlined_call_operand.vmem [shape: bf16[32,32], index: 2, kind: input, shape index: {}]
  %s3 = inlined_call_operand.hbm [shape: bf16[32,128], index: 3, kind: input, shape index: {}]
  %s4 = inlined_call_operand.vmem [shape: f32[4,32], index: 4, kind: input, shape index: {}]
  %s5 = inlined_call_operand.vmem [shape: f32[1,128], index: 5, kind: input, shape index: {}]
  %s6 = inlined_call_operand.hbm [shape: f32[8,128], index: 6, kind: output, shape index: {}]
  %s7 = sld [smem:[#allocation0]]
  $region42: #{mlp_forward.1} parent=0
    _
  %s9 = ssub.s32 1, %s7
  %s10 = scalar_select 0, %s9, %s7
  $region1: #{mlp_forward.1} parent=0
    #allocation2 [shape = 'u8[8192]{0}', space=vmem, size = 0x2000, scoped, tag = 'input window, operand 1, single buffered']
    #allocation3 [shape = 's32[1]{0}', space=sflag, size = 0x4, scoped, tag = 'scoped memory for mlp_forward.1']
    #allocation4 [shape = 's32[1]{0}', space=sflag, size = 0x4, scoped, tag = 'scoped memory for mlp_forward.1']
    #allocation5 [shape = 'u8[8192]{0}', space=vmem, size = 0x2000, scoped, tag = 'input window, operand 3, single buffered']
    #allocation6 [shape = 's32[1]{0}', space=sflag, size = 0x4, scoped, tag = 'scoped memory for mlp_forward.1']
    #allocation7 [shape = 'u8[4096]{0}', space=vmem, size = 0x1000, scoped, tag = 'output window, operand 0, single buffered']
    %11 = vsyncpa [#allocation3], 0
    %12 = vsyncpa [#allocation6], 0
    %13 = vsyncpa [#allocation4], 0
    // Predicated region
    $region2: #{mlp_forward.1} parent=1 // pred_check
      _
    $region3: #{mlp_forward.1} parent=1 // pred_check_branch
      %15 = sbr.rel (0) target = $region5
    $region4: #{mlp_forward.1} parent=1 // pred_region
      _
    $region5: #{mlp_forward.1} parent=1 // pred_fallthru
      _
    // Predicated region
    $region6: #{mlp_forward.1} parent=1 // pred_check
      _
    $region7: #{mlp_forward.1} parent=1 // pred_check_branch
      %17 = sbr.rel (0) target = $region9
    $region8: #{mlp_forward.1} parent=1 // pred_region
      %s19 = ssub.s32 256, 256
      %20 = vsyncadd [#allocation3], %s19
      %s21 = sshll.u32 [#allocation2], 4
      %s22 = int_to_ptr.vmem [resolvable:$true] %s21
      %27 = dma.hbm_to_vmem [thread:$0]  %s1, 256, %s22, [#allocation3], 64, 64, 4
    $region9: #{mlp_forward.1} parent=1 // pred_fallthru
      _
    // Predicated region
    $region10: #{mlp_forward.1} parent=1 // pred_check
      _
    $region11: #{mlp_forward.1} parent=1 // pred_check_branch
      %29 = sbr.rel (0) target = $region13
    $region12: #{mlp_forward.1} parent=1 // pred_region
      _
    $region13: #{mlp_forward.1} parent=1 // pred_fallthru
      _
    // Predicated region
    $region14: #{mlp_forward.1} parent=1 // pred_check
      _
    $region15: #{mlp_forward.1} parent=1 // pred_check_branch
      %31 = sbr.rel (0) target = $region17
    $region16: #{mlp_forward.1} parent=1 // pred_region
      %s33 = ssub.s32 256, 256
      %34 = vsyncadd [#allocation6], %s33
      %s35 = sshll.u32 [#allocation5], 4
      %s36 = int_to_ptr.vmem [resolvable:$true] %s35
      %41 = dma.hbm_to_vmem [thread:$0]  %s3, 256, %s36, [#allocation6], 64, 64, 4
    $region17: #{mlp_forward.1} parent=1 // pred_fallthru
      _
    // Predicated region
    $region18: #{mlp_forward.1} parent=1 // pred_check
      _
    $region19: #{mlp_forward.1} parent=1 // pred_check_branch
      %43 = sbr.rel (0) target = $region21
    $region20: #{mlp_forward.1} parent=1 // pred_region
      _
    $region21: #{mlp_forward.1} parent=1 // pred_fallthru
      _
    // Predicated region
    $region22: #{mlp_forward.1} parent=1 // pred_check
      _
    $region23: #{mlp_forward.1} parent=1 // pred_check_branch
      %45 = sbr.rel (0) target = $region25
    $region24: #{mlp_forward.1} parent=1 // pred_region
      _
    $region25: #{mlp_forward.1} parent=1 // pred_fallthru
      _
    // Predicated region
    $region26: #{mlp_forward.1} parent=1 // pred_check
      _
    $region27: #{mlp_forward.1} parent=1 // pred_check_branch
      %47 = sbr.rel (0) target = $region29
    $region28: #{mlp_forward.1} parent=1 // pred_region
      %48 = dma.done [#allocation3], 256
    $region29: #{mlp_forward.1} parent=1 // pred_fallthru
      _
    // Predicated region
    $region30: #{mlp_forward.1} parent=1 // pred_check
      _
    $region31: #{mlp_forward.1} parent=1 // pred_check_branch
      %50 = sbr.rel (0) target = $region33
    $region32: #{mlp_forward.1} parent=1 // pred_region
      %51 = dma.done [#allocation6], 256
    $region33: #{mlp_forward.1} parent=1 // pred_fallthru
      _
    %v53 = vld [vmem:[%s0] sm:$0xf]
    %v54 = vld [vmem:[%s4] sm:$0xf]
    %v55 = vld [vmem:[#allocation2] sm:$0xf]
    %v56 = vld [vmem:[#allocation2 + $0x4] sm:$0xf]
    %v57 = vld [vmem:[#allocation2 + $0x8] sm:$0xf]
    %v58 = vld [vmem:[#allocation2 + $0xc] sm:$0xf]
    %v63 = vunpack.c.l.b16 %v55
    %v64 = vunpack.c.l.b16 %v56
    %v65 = vunpack.c.l.b16 %v57
    %v66 = vunpack.c.l.b16 %v58
    %v67 = vpack.c.b16 %v64, %v63
    %v68 = vpack.c.b16 %v66, %v65
    %vm71 = vcmask 261120
    %v73 = vsel %vm71, %v53, 0
    %75 = vmatprep.subr.bf16.mxu0 0
    %76 = vmatpush1.bf16.msra.mxu0 %v67
    %77 = vmatprep.subr.bf16.mxu0 0
    %78 = vmatpush1.bf16.msra.mxu0 %v68
    %79 = vmatprep.subr.bf16.mxu0 0
    %80 = vmatpush1.bf16.msra.mxu0 0
    %81 = vmatprep.subr.bf16.mxu0 0
    %82 = vmatpush1.bf16.msra.mxu0 0
    %83 = vmatprep.subr.bf16.mxu0 0
    %84 = vmatpush1.bf16.msra.mxu0 0
    %85 = vmatprep.subr.bf16.mxu0 0
    %86 = vmatpush1.bf16.msra.mxu0 0
    %87 = vmatprep.subr.bf16.mxu0 0
    %88 = vmatpush1.bf16.msra.mxu0 0
    %89 = vmatprep.subr.bf16.mxu0 0
    %90 = vmatpush1.bf16.msra.mxu0 0
    %91 = vmatprep.subr.bf16.mxu0 0
    %92 = vmatpush1.bf16.msra.mxu0 0
    %93 = vmatprep.subr.bf16.mxu0 0
    %94 = vmatpush1.bf16.msra.mxu0 0
    %95 = vmatprep.subr.bf16.mxu0 0
    %96 = vmatpush1.bf16.msra.mxu0 0
    %97 = vmatprep.subr.bf16.mxu0 0
    %98 = vmatpush1.bf16.msra.mxu0 0
    %99 = vmatprep.subr.bf16.mxu0 0
    %100 = vmatpush1.bf16.msra.mxu0 0
    %101 = vmatprep.subr.bf16.mxu0 0
    %102 = vmatpush1.bf16.msra.mxu0 0
    %103 = vmatprep.subr.bf16.mxu0 0
    %104 = vmatpush1.bf16.msra.mxu0 0
    %105 = vmatprep.subr.bf16.mxu0 0
    %106 = vmatpush1.bf16.msra.mxu0 0
    %107 = vmatprep.mubr.bf16.mxu0 0
    %108 = vmatmul.mubr.bf16.gmra.mrb[0].mxu0 %v73
    %v109 = vpop.f32.mrb[0].mxu0
    %v110 = vadd.f32 0.0, %v109
    %v111 = vpop.f32.mrb[0].mxu0
    %v112 = vpop.f32.mrb[0].mxu0
    %v113 = vpop.f32.mrb[0].mxu0
    %114 = vdwg.mxu0
    %v115 = vsel %vm71, %v110, 0.0
    %v116 = vrot.slane %v115, 4
    %v117 = vadd.f32 %v115, %v116
    %v118 = vrot.slane %v117, 2
    %v119 = vadd.f32 %v117, %v118
    %v120 = vrot.slane %v119, 1
    %v121 = vadd.f32 %v119, %v120
    %v122 = vmul.f32 %v121, 0.125
    %v123 = vsub.f32 %v110, %v122
    %v124 = vmul.f32 %v123, %v123
    %v125 = vsel %vm71, %v124, 0.0
    %v126 = vrot.slane %v125, 4
    %v127 = vadd.f32 %v125, %v126
    %v128 = vrot.slane %v127, 2
    %v129 = vadd.f32 %v127, %v128
    %v130 = vrot.slane %v129, 1
    %v131 = vadd.f32 %v129, %v130
    %v132 = vmul.f32 %v131, 0.125
    %v133 = vadd.f32 %v132, 1e-05
    %v134 = vrsqrt.pop %v133
    %v135 = vmul.f32 %v134, %v54
    %v136 = vlaneseq
    %v137 = vshrl.u32 %v136, 7
    %v138 = vsub.s32 0, %v137
    %v139 = vrot.slane %v135, %v138
    %v140 = vmul.f32 %v123, %v139
    %v141 = vlaneseq
    %v142 = vshrl.u32 %v141, 7
    %v143 = vsub.s32 1, %v142
    %v144 = vrot.slane %v54, %v143
    %v145 = vadd.f32 %v140, %v144
    %v146 = vmax.f32 %v145, 0.0
    %v147 = vpack.c.bf16 %v146, %v146
    %v148 = vld [vmem:[%s2] sm:$0xf]
    %v149 = vld [vmem:[%s2 + $0x4] sm:$0xf]
    %v150 = vld [vmem:[%s2 + $0x8] sm:$0xf]
    %v151 = vld [vmem:[%s2 + $0xc] sm:$0xf]
    %v156 = vunpack.c.l.b16 %v148
    %v157 = vunpack.c.l.b16 %v149
    %v158 = vunpack.c.l.b16 %v150
    %v159 = vunpack.c.l.b16 %v151
    %v160 = vpack.c.b16 %v157, %v156
    %v161 = vpack.c.b16 %v159, %v158
    %v165 = vsel %vm71, %v147, 0
    %167 = vmatprep.subr.bf16.mxu0 0
    %168 = vmatpush1.bf16.msra.mxu0 %v160
    %169 = vmatprep.subr.bf16.mxu0 0
    %170 = vmatpush1.bf16.msra.mxu0 %v161
    %171 = vmatprep.subr.bf16.mxu0 0
    %172 = vmatpush1.bf16.msra.mxu0 0
    %173 = vmatprep.subr.bf16.mxu0 0
    %174 = vmatpush1.bf16.msra.mxu0 0
    %175 = vmatprep.subr.bf16.mxu0 0
    %176 = vmatpush1.bf16.msra.mxu0 0
    %177 = vmatprep.subr.bf16.mxu0 0
    %178 = vmatpush1.bf16.msra.mxu0 0
    %179 = vmatprep.subr.bf16.mxu0 0
    %180 = vmatpush1.bf16.msra.mxu0 0
    %181 = vmatprep.subr.bf16.mxu0 0
    %182 = vmatpush1.bf16.msra.mxu0 0
    %183 = vmatprep.subr.bf16.mxu0 0
    %184 = vmatpush1.bf16.msra.mxu0 0
    %185 = vmatprep.subr.bf16.mxu0 0
    %186 = vmatpush1.bf16.msra.mxu0 0
    %187 = vmatprep.subr.bf16.mxu0 0
    %188 = vmatpush1.bf16.msra.mxu0 0
    %189 = vmatprep.subr.bf16.mxu0 0
    %190 = vmatpush1.bf16.msra.mxu0 0
    %191 = vmatprep.subr.bf16.mxu0 0
    %192 = vmatpush1.bf16.msra.mxu0 0
    %193 = vmatprep.subr.bf16.mxu0 0
    %194 = vmatpush1.bf16.msra.mxu0 0
    %195 = vmatprep.subr.bf16.mxu0 0
    %196 = vmatpush1.bf16.msra.mxu0 0
    %197 = vmatprep.subr.bf16.mxu0 0
    %198 = vmatpush1.bf16.msra.mxu0 0
    %199 = vmatprep.mubr.bf16.mxu0 0
    %200 = vmatmul.mubr.bf16.gmra.mrb[0].mxu0 %v165
    %v201 = vpop.f32.mrb[0].mxu0
    %v202 = vadd.f32 0.0, %v201
    %v203 = vpop.f32.mrb[0].mxu0
    %v204 = vpop.f32.mrb[0].mxu0
    %v205 = vpop.f32.mrb[0].mxu0
    %206 = vdwg.mxu0
    %v207 = vsel %vm71, %v202, 0.0
    %v208 = vrot.slane %v207, 4
    %v209 = vadd.f32 %v207, %v208
    %v210 = vrot.slane %v209, 2
    %v211 = vadd.f32 %v209, %v210
    %v212 = vrot.slane %v211, 1
    %v213 = vadd.f32 %v211, %v212
    %v214 = vmul.f32 %v213, 0.125
    %v215 = vsub.f32 %v202, %v214
    %v216 = vmul.f32 %v215, %v215
    %v217 = vsel %vm71, %v216, 0.0
    %v218 = vrot.slane %v217, 4
    %v219 = vadd.f32 %v217, %v218
    %v220 = vrot.slane %v219, 2
    %v221 = vadd.f32 %v219, %v220
    %v222 = vrot.slane %v221, 1
    %v223 = vadd.f32 %v221, %v222
    %v224 = vmul.f32 %v223, 0.125
    %v225 = vadd.f32 %v224, 1e-05
    %v226 = vrsqrt.pop %v225
    %v227 = vmul.f32 %v226, %v54
    %v228 = vlaneseq
    %v229 = vshrl.u32 %v228, 7
    %v230 = vsub.s32 2, %v229
    %v231 = vrot.slane %v227, %v230
    %v232 = vmul.f32 %v215, %v231
    %v233 = vlaneseq
    %v234 = vshrl.u32 %v233, 7
    %v235 = vsub.s32 3, %v234
    %v236 = vrot.slane %v54, %v235
    %v237 = vadd.f32 %v232, %v236
    %v238 = vmax.f32 %v237, 0.0
    %v239 = vpack.c.bf16 %v238, %v238
    %v240 = vld [vmem:[#allocation5] sm:$0xf]
    %v241 = vld [vmem:[#allocation5 + $0x4] sm:$0xf]
    %v242 = vld [vmem:[#allocation5 + $0x8] sm:$0xf]
    %v243 = vld [vmem:[#allocation5 + $0xc] sm:$0xf]
    %v244 = vld [vmem:[%s5] sm:$0x1]
    %v246 = vlaneseq
    %v247 = vshrl.u32 %v246, 7
    %v248 = vsub.s32 0, %v247
    %v249 = vrot.slane %v244, %v248
    %v255 = vunpack.c.l.b16 %v240
    %v256 = vunpack.c.l.b16 %v241
    %v257 = vunpack.c.l.b16 %v242
    %v258 = vunpack.c.l.b16 %v243
    %v259 = vpack.c.b16 %v256, %v255
    %v260 = vpack.c.b16 %v258, %v257
    %v264 = vsel %vm71, %v239, 0
    %266 = vmatprep.subr.bf16.mxu0 0
    %267 = vmatpush1.bf16.msra.mxu0 %v259
    %268 = vmatprep.subr.bf16.mxu0 0
    %269 = vmatpush1.bf16.msra.mxu0 %v260
    %270 = vmatprep.subr.bf16.mxu0 0
    %271 = vmatpush1.bf16.msra.mxu0 0
    %272 = vmatprep.subr.bf16.mxu0 0
    %273 = vmatpush1.bf16.msra.mxu0 0
    %274 = vmatprep.subr.bf16.mxu0 0
    %275 = vmatpush1.bf16.msra.mxu0 0
    %276 = vmatprep.subr.bf16.mxu0 0
    %277 = vmatpush1.bf16.msra.mxu0 0
    %278 = vmatprep.subr.bf16.mxu0 0
    %279 = vmatpush1.bf16.msra.mxu0 0
    %280 = vmatprep.subr.bf16.mxu0 0
    %281 = vmatpush1.bf16.msra.mxu0 0
    %282 = vmatprep.subr.bf16.mxu0 0
    %283 = vmatpush1.bf16.msra.mxu0 0
    %284 = vmatprep.subr.bf16.mxu0 0
    %285 = vmatpush1.bf16.msra.mxu0 0
    %286 = vmatprep.subr.bf16.mxu0 0
    %287 = vmatpush1.bf16.msra.mxu0 0
    %288 = vmatprep.subr.bf16.mxu0 0
    %289 = vmatpush1.bf16.msra.mxu0 0
    %290 = vmatprep.subr.bf16.mxu0 0
    %291 = vmatpush1.bf16.msra.mxu0 0
    %292 = vmatprep.subr.bf16.mxu0 0
    %293 = vmatpush1.bf16.msra.mxu0 0
    %294 = vmatprep.subr.bf16.mxu0 0
    %295 = vmatpush1.bf16.msra.mxu0 0
    %296 = vmatprep.subr.bf16.mxu0 0
    %297 = vmatpush1.bf16.msra.mxu0 0
    %298 = vmatprep.mubr.bf16.mxu0 0
    %299 = vmatmul.mubr.bf16.gmra.mrb[0].mxu0 %v264
    %v300 = vpop.f32.mrb[0].mxu0
    %v301 = vadd.f32 %v249, %v300
    %v302 = vpop.f32.mrb[0].mxu0
    %v303 = vpop.f32.mrb[0].mxu0
    %v304 = vpop.f32.mrb[0].mxu0
    %305 = vdwg.mxu0
    %306 = vst [vmem:[#allocation7] sm:$0xff] %v301
    // Predicated region
    $region34: #{mlp_forward.1} parent=1 // pred_check
      _
    $region35: #{mlp_forward.1} parent=1 // pred_check_branch
      %308 = sbr.rel (0) target = $region37
    $region36: #{mlp_forward.1} parent=1 // pred_region
      %s310 = ssub.s32 128, 128
      %311 = vsyncadd [#allocation4], %s310
      %s313 = sshll.u32 [#allocation7], 4
      %s314 = int_to_ptr.vmem [resolvable:$true] %s313
      %316 = dma.vmem_to_hbm [thread:$0]  %s314, 128, %s6, [#allocation4]
    $region37: #{mlp_forward.1} parent=1 // pred_fallthru
      _
    // Predicated region
    $region38: #{mlp_forward.1} parent=1 // pred_check
      _
    $region39: #{mlp_forward.1} parent=1 // pred_check_branch
      %318 = sbr.rel (0) target = $region41
    $region40: #{mlp_forward.1} parent=1 // pred_region
      %319 = dma.done [#allocation4], 128
    $region41: #{mlp_forward.1} parent=1 // pred_fallthru
      _
    %320 = vsyncpa [#allocation3], 1
    %321 = vsyncpa [#allocation6], 1
    %322 = vsyncpa [#allocation4], 1

</llo_original>
